<compile_context>
chip_gen: v7x
topology: tpu7x:2x2x1
jax: 0.10.0
libtpu: 0.0.40
codegen_flags: <defaults>
</compile_context>

<pallas_src>
import jax
import jax.numpy as jnp
from jax.experimental import pallas as pl
from jax.experimental.pallas import tpu as pltpu


def _round_up(x, m):
    return ((x + m - 1) // m) * m


# ----------------------------- Pallas kernel --------------------------------
def _proj_kernel(x_ref, w_ref, b_ref, o_ref):
    # x_ref: (TM, K) f32   w_ref: (K, N) bf16   b_ref: (1, N) f32   o_ref: (TM, N) f32
    x_bf16 = x_ref[...].astype(jnp.bfloat16)          # VPU convert, hidden under MXU
    acc = jnp.dot(x_bf16, w_ref[...], preferred_element_type=jnp.float32)
    o_ref[...] = acc + b_ref[...]                      # f32 epilogue


def proj_1x1_matmul(x_flat, w_kn_bf16, bias_2d, *, tm=256):
    """Y = X @ W + b  (bf16 MXU operands, f32 accumulation / epilogue).

    x_flat    : (M, K) float32
    w_kn_bf16 : (K, N) bfloat16   (pre-transposed at init)
    bias_2d   : (1, N) float32    (pre-shaped at init)
    returns (M, N) float32
    """
    M, K = x_flat.shape
    _, N = w_kn_bf16.shape

    # Row tile: multiple of 8 sublanes; don't over-pad tiny M.
    tm = min(tm, _round_up(M, 8))
    m_pad = _round_up(M, tm)
    if m_pad != M:
        x_flat = jnp.pad(x_flat, ((0, m_pad - M), (0, 0)))

    grid = (m_pad // tm,)
    out = pl.pallas_call(
        _proj_kernel,
        out_shape=jax.ShapeDtypeStruct((m_pad, N), jnp.float32),
        grid=grid,
        in_specs=[
            pl.BlockSpec((tm, K), lambda i: (i, 0)),   # X streams over M
            pl.BlockSpec((K, N), lambda i: (0, 0)),    # W resident across grid
            pl.BlockSpec((1, N), lambda i: (0, 0)),    # bias resident
        ],
        out_specs=pl.BlockSpec((tm, N), lambda i: (i, 0)),
        compiler_params=pltpu.CompilerParams(
            dimension_semantics=("parallel",)),        # 2 TCs on v7x at large M
        cost_estimate=pl.CostEstimate(
            flops=2 * m_pad * K * N,
            transcendentals=0,
            bytes_accessed=(m_pad * K * 4 + K * N * 2 + N * 4 + m_pad * N * 4)),
    )(x_flat, w_kn_bf16, bias_2d)

    return out[:M] if m_pad != M else out


# ------------------------------ Encoder forward ------------------------------
class EncoderPallas:
    """ViT-B-32 branch of `Encoder`: feat_dim=768, feat_size=7, proj = 1x1 conv."""

    def __init__(self, d_model, feat_dim=768, feat_size=7, key=None):
        self.feat_dim = feat_dim
        self.feat_size = feat_size
        self.d_model = d_model
        key = jax.random.PRNGKey(0) if key is None else key
        kw, kb = jax.random.split(key)
        # nn.Conv2d(feat_dim, d_model, kernel_size=1): weight (d_model, feat_dim, 1, 1)
        fan_in = feat_dim  # kernel_size = 1
        bound = 1.0 / (fan_in ** 0.5)
        conv_w = jax.random.uniform(
            kw, (d_model, feat_dim, 1, 1), jnp.float32, -bound, bound)
        conv_b = jax.random.uniform(
            kb, (d_model,), jnp.float32, -bound, bound)
        # Hoist all layout plumbing out of the hot path:
        self.conv_w = conv_w                                        # kept for reference
        self.w_kn = conv_w.reshape(d_model, feat_dim).T             # (K, N) f32
        self.w_kn_bf16 = self.w_kn.astype(jnp.bfloat16)             # MXU operand
        self.bias_2d = conv_b.reshape(1, d_model)                   # (1, N) f32

    def __call__(self, tokens):
        """tokens: (B, feat_size*feat_size, feat_dim) — backbone patch tokens.

        Returns NCHW features (B, d_model, feat_size, feat_size), matching
        PyTorch's `Encoder.forward` for a ViT backbone with a projection.
        """
        # TODO(synk): the pretrained ViT backbone is an external model and is not
        # re-implemented; `tokens` stands in for `self.net(image)[1]`.
        B = tokens.shape[0]
        fs, C = self.feat_size, self.feat_dim
        # feat[1].reshape(-1, fs, fs, feat_dim)  -> NHWC (lane-dense channels)
        x_flat = tokens.reshape(B * fs * fs, C)                      # (M, K)
        y_flat = proj_1x1_matmul(x_flat, self.w_kn_bf16, self.bias_2d)
        y_nhwc = y_flat.reshape(B, fs, fs, self.d_model)
        # .permute(0, 3, 1, 2) -> NCHW, done in XLA (kernel output stays lane-dense)
        return jnp.transpose(y_nhwc, (0, 3, 1, 2))


# ---------------------------------- main -------------------------------------
if __name__ == "__main__":
    B = 2
    feat_dim = 768      # ViT-B-32 branch
    feat_size = 7
    d_model = 256       # != feat_dim, so self.proj is active

    key = jax.random.PRNGKey(0)
    k_tok, k_par = jax.random.split(key)
    tokens = jax.random.normal(k_tok, (B, feat_size * feat_size, feat_dim),
                               dtype=jnp.float32)

    enc = EncoderPallas(d_model=d_model, feat_dim=feat_dim,
                        feat_size=feat_size, key=k_par)
    fwd = jax.jit(lambda t: enc(t))
    out = jax.block_until_ready(fwd(tokens))

    # Reference check in plain JAX with the same bf16 MXU operands / f32 accum.
    x_flat = tokens.reshape(B * feat_size * feat_size, feat_dim)
    ref_flat = jnp.dot(x_flat.astype(jnp.bfloat16), enc.w_kn_bf16,
                       preferred_element_type=jnp.float32) + enc.bias_2d
    ref = jnp.transpose(
        ref_flat.reshape(B, feat_size, feat_size, d_model), (0, 3, 1, 2))

    assert out.shape == (B, d_model, feat_size, feat_size), out.shape
    assert jnp.allclose(out, ref, atol=1e-3, rtol=1e-3)
    print("KERNEL_OK")
</pallas_src>

<mosaic_0001>
module attributes {stable_mosaic.version = 11 : i64} {
  func.func @_proj_kernel(%arg0: i32, %arg1: memref<104x768xf32, #tpu.memory_space<vmem>>, %arg2: memref<768x256xbf16, #tpu.memory_space<vmem>>, %arg3: memref<1x256xf32, #tpu.memory_space<vmem>>, %arg4: memref<104x256xf32, #tpu.memory_space<vmem>>) attributes {dimension_semantics = [#tpu.dimension_semantics<parallel>], iteration_bounds = array<i64: 1>, scalar_prefetch = 0 : i64, scratch_operands = 0 : i64, tpu.core_type = #tpu.core_type<tc>, window_params = [{transform_indices = @transform_0, window_bounds = array<i64: 104, 768>}, {pipeline_mode = #tpu.pipeline_mode<synchronous>, transform_indices = @transform_1, window_bounds = array<i64: 768, 256>}, {pipeline_mode = #tpu.pipeline_mode<synchronous>, transform_indices = @transform_2, window_bounds = array<i64: 1, 256>}, {transform_indices = @transform_3, window_bounds = array<i64: 104, 256>}]} {
    %c0 = arith.constant 0 : index
    %c0_0 = arith.constant 0 : index
    %0 = vector.load %arg1[%c0, %c0_0] : memref<104x768xf32, #tpu.memory_space<vmem>>, vector<104x768xf32>
    %1 = arith.truncf %0 : vector<104x768xf32> to vector<104x768xbf16>
    %c0_1 = arith.constant 0 : index
    %c0_2 = arith.constant 0 : index
    %2 = vector.load %arg2[%c0_1, %c0_2] : memref<768x256xbf16, #tpu.memory_space<vmem>>, vector<768x256xbf16>
    %cst = arith.constant dense<0.000000e+00> : vector<104x256xf32>
    %3 = tpu.matmul %1, %2, %cst {dimension_numbers = #tpu.dot_dimension_numbers<[1], [0], [0], [1], [0, 0, 1, 1], [], []>} : vector<104x768xbf16>, vector<768x256xbf16>, vector<104x256xf32> -> vector<104x256xf32>
    %c0_3 = arith.constant 0 : index
    %c0_4 = arith.constant 0 : index
    %4 = vector.load %arg3[%c0_3, %c0_4] : memref<1x256xf32, #tpu.memory_space<vmem>>, vector<1x256xf32>
    %5 = vector.broadcast %4 : vector<1x256xf32> to vector<104x256xf32>
    %6 = arith.addf %3, %5 : vector<104x256xf32>
    %c0_5 = arith.constant 0 : index
    %c0_6 = arith.constant 0 : index
    %7 = vector.load %arg4[%c0_5, %c0_6] : memref<104x256xf32, #tpu.memory_space<vmem>>, vector<104x256xf32>
    tpu.vector_store %arg4[%c0_5, %c0_6], %6 {strides = array<i32>} : memref<104x256xf32, #tpu.memory_space<vmem>>, vector<104x256xf32>,
    return
  }
  func.func @transform_0(%arg0: i32) -> (i32, i32) {
    %c0_i32 = arith.constant 0 : i32
    %c0_i32_0 = arith.constant 0 : i32
    return %arg0, %c0_i32 : i32, i32
  }
  func.func @transform_1(%arg0: i32) -> (i32, i32) {
    %c0_i32 = arith.constant 0 : i32
    %c0_i32_0 = arith.constant 0 : i32
    %c0_i32_1 = arith.constant 0 : i32
    return %c0_i32, %c0_i32_0 : i32, i32
  }
  func.func @transform_2(%arg0: i32) -> (i32, i32) {
    %c0_i32 = arith.constant 0 : i32
    %c0_i32_0 = arith.constant 0 : i32
    %c0_i32_1 = arith.constant 0 : i32
    return %c0_i32, %c0_i32_0 : i32, i32
  }
  func.func @transform_3(%arg0: i32) -> (i32, i32) {
    %c0_i32 = arith.constant 0 : i32
    %c0_i32_0 = arith.constant 0 : i32
    return %arg0, %c0_i32 : i32, i32
  }
}

</mosaic_0001>

<llo_original>
// kernel: _lambda_.1
$region0: #{_lambda_.1}
  #allocation0 [shape = 'u32[]', space=smem, size = 0x4, offset = 0x4, fixed_abs, tag = 'smem constant byte address 0x4 - core index']
  #allocation1 [shape = 'u32[144,128]{1,0:T(1,128)}', space=vmem, size = 0x12000, scoped, tag = 'internal scratch']
  %s0 = inlined_call_operand.vmem [shape: f32[104,768], index: 0, kind: input, shape index: {}]
  %s1 = inlined_call_operand.vmem [shape: bf16[768,256], index: 1, kind: input, shape index: {}]
  %s2 = inlined_call_operand.vmem [shape: f32[1,256], index: 2, kind: input, shape index: {}]
  %s3 = inlined_call_operand.vmem [shape: f32[104,256], index: 3, kind: output, shape index: {}]
  %s4 = sld [smem:[#allocation0]]
  $region22: #{_lambda_.1} parent=0
    _
  %s6 = ssub.s32 1, %s4
  %s7 = scalar_select 0, %s6, %s4
  // Predicated region
  $region2: #{_lambda_.1} parent=0 // pred_check
    _
  $region3: #{_lambda_.1} parent=0 // pred_check_branch
    %9 = sbr.rel (0) target = $region5
  $region4: #{_lambda_.1} parent=0 // pred_region
    _
  $region5: #{_lambda_.1} parent=0 // pred_fallthru
    _
  // Predicated region
  $region6: #{_lambda_.1} parent=0 // pred_check
    _
  $region7: #{_lambda_.1} parent=0 // pred_check_branch
    %11 = sbr.rel (0) target = $region9
  $region8: #{_lambda_.1} parent=0 // pred_region
    _
  $region9: #{_lambda_.1} parent=0 // pred_fallthru
    _
  // Predicated region
  $region10: #{_lambda_.1} parent=0 // pred_check
    _
  $region11: #{_lambda_.1} parent=0 // pred_check_branch
    %13 = sbr.rel (0) target = $region13
  $region12: #{_lambda_.1} parent=0 // pred_region
    _
  $region13: #{_lambda_.1} parent=0 // pred_fallthru
    _
  %v14 = vld [vmem:[%s0] sm:$0xff]
  %v15 = vld [vmem:[%s0 + $0x8] sm:$0xff]
  %v16 = vld [vmem:[%s0 + $0x10] sm:$0xff]
  %v17 = vld [vmem:[%s0 + $0x18] sm:$0xff]
  %v18 = vld [vmem:[%s0 + $0x20] sm:$0xff]
  %v19 = vld [vmem:[%s0 + $0x28] sm:$0xff]
  %v20 = vld [vmem:[%s0 + $0x30] sm:$0xff]
  %v21 = vld [vmem:[%s0 + $0x38] sm:$0xff]
  %v22 = vld [vmem:[%s0 + $0x40] sm:$0xff]
  %v23 = vld [vmem:[%s0 + $0x48] sm:$0xff]
  %v24 = vld [vmem:[%s0 + $0x50] sm:$0xff]
  %v25 = vld [vmem:[%s0 + $0x58] sm:$0xff]
  %v26 = vld [vmem:[%s0 + $0x60] sm:$0xff]
  %v27 = vld [vmem:[%s0 + $0x68] sm:$0xff]
  %v28 = vld [vmem:[%s0 + $0x70] sm:$0xff]
  %v29 = vld [vmem:[%s0 + $0x78] sm:$0xff]
  %v30 = vld [vmem:[%s0 + $0x80] sm:$0xff]
  %v31 = vld [vmem:[%s0 + $0x88] sm:$0xff]
  %v32 = vld [vmem:[%s0 + $0x90] sm:$0xff]
  %v33 = vld [vmem:[%s0 + $0x98] sm:$0xff]
  %v34 = vld [vmem:[%s0 + $0xa0] sm:$0xff]
  %v35 = vld [vmem:[%s0 + $0xa8] sm:$0xff]
  %v36 = vld [vmem:[%s0 + $0xb0] sm:$0xff]
  %v37 = vld [vmem:[%s0 + $0xb8] sm:$0xff]
  %v38 = vld [vmem:[%s0 + $0xc0] sm:$0xff]
  %v39 = vld [vmem:[%s0 + $0xc8] sm:$0xff]
  %v40 = vld [vmem:[%s0 + $0xd0] sm:$0xff]
  %v41 = vld [vmem:[%s0 + $0xd8] sm:$0xff]
  %v42 = vld [vmem:[%s0 + $0xe0] sm:$0xff]
  %v43 = vld [vmem:[%s0 + $0xe8] sm:$0xff]
  %v44 = vld [vmem:[%s0 + $0xf0] sm:$0xff]
  %v45 = vld [vmem:[%s0 + $0xf8] sm:$0xff]
  %v46 = vld [vmem:[%s0 + $0x100] sm:$0xff]
  %v47 = vld [vmem:[%s0 + $0x108] sm:$0xff]
  %v48 = vld [vmem:[%s0 + $0x110] sm:$0xff]
  %v49 = vld [vmem:[%s0 + $0x118] sm:$0xff]
  %v50 = vld [vmem:[%s0 + $0x120] sm:$0xff]
  %v51 = vld [vmem:[%s0 + $0x128] sm:$0xff]
  %v52 = vld [vmem:[%s0 + $0x130] sm:$0xff]
  %v53 = vld [vmem:[%s0 + $0x138] sm:$0xff]
  %v54 = vld [vmem:[%s0 + $0x140] sm:$0xff]
  %v55 = vld [vmem:[%s0 + $0x148] sm:$0xff]
  %v56 = vld [vmem:[%s0 + $0x150] sm:$0xff]
  %v57 = vld [vmem:[%s0 + $0x158] sm:$0xff]
  %v58 = vld [vmem:[%s0 + $0x160] sm:$0xff]
  %v59 = vld [vmem:[%s0 + $0x168] sm:$0xff]
  %v60 = vld [vmem:[%s0 + $0x170] sm:$0xff]
  %v61 = vld [vmem:[%s0 + $0x178] sm:$0xff]
  %v62 = vld [vmem:[%s0 + $0x180] sm:$0xff]
  %v63 = vld [vmem:[%s0 + $0x188] sm:$0xff]
  %v64 = vld [vmem:[%s0 + $0x190] sm:$0xff]
  %v65 = vld [vmem:[%s0 + $0x198] sm:$0xff]
  %v66 = vld [vmem:[%s0 + $0x1a0] sm:$0xff]
  %v67 = vld [vmem:[%s0 + $0x1a8] sm:$0xff]
  %v68 = vld [vmem:[%s0 + $0x1b0] sm:$0xff]
  %v69 = vld [vmem:[%s0 + $0x1b8] sm:$0xff]
  %v70 = vld [vmem:[%s0 + $0x1c0] sm:$0xff]
  %v71 = vld [vmem:[%s0 + $0x1c8] sm:$0xff]
  %v72 = vld [vmem:[%s0 + $0x1d0] sm:$0xff]
  %v73 = vld [vmem:[%s0 + $0x1d8] sm:$0xff]
  %v74 = vld [vmem:[%s0 + $0x1e0] sm:$0xff]
  %v75 = vld [vmem:[%s0 + $0x1e8] sm:$0xff]
  %v76 = vld [vmem:[%s0 + $0x1f0] sm:$0xff]
  %v77 = vld [vmem:[%s0 + $0x1f8] sm:$0xff]
  %v78 = vld [vmem:[%s0 + $0x200] sm:$0xff]
  %v79 = vld [vmem:[%s0 + $0x208] sm:$0xff]
  %v80 = vld [vmem:[%s0 + $0x210] sm:$0xff]
  %v81 = vld [vmem:[%s0 + $0x218] sm:$0xff]
  %v82 = vld [vmem:[%s0 + $0x220] sm:$0xff]
  %v83 = vld [vmem:[%s0 + $0x228] sm:$0xff]
  %v84 = vld [vmem:[%s0 + $0x230] sm:$0xff]
  %v85 = vld [vmem:[%s0 + $0x238] sm:$0xff]
  %v86 = vld [vmem:[%s0 + $0x240] sm:$0xff]
  %v87 = vld [vmem:[%s0 + $0x248] sm:$0xff]
  %v88 = vld [vmem:[%s0 + $0x250] sm:$0xff]
  %v89 = vld [vmem:[%s0 + $0x258] sm:$0xff]
  %v90 = vld [vmem:[%s0 + $0x260] sm:$0xff]
  %v91 = vld [vmem:[%s0 + $0x268] sm:$0xff]
  %v92 = vpack.c.bf16 %v20, %v14
  %v93 = vpack.c.bf16 %v21, %v15
  %v94 = vpack.c.bf16 %v22, %v16
  %v95 = vpack.c.bf16 %v23, %v17
  %v96 = vpack.c.bf16 %v24, %v18
  %v97 = vpack.c.bf16 %v25, %v19
  %v98 = vpack.c.bf16 %v32, %v26
  %v99 = vpack.c.bf16 %v33, %v27
  %v100 = vpack.c.bf16 %v34, %v28
  %v101 = vpack.c.bf16 %v35, %v29
  %v102 = vpack.c.bf16 %v36, %v30
  %v103 = vpack.c.bf16 %v37, %v31
  %v104 = vpack.c.bf16 %v44, %v38
  %v105 = vpack.c.bf16 %v45, %v39
  %v106 = vpack.c.bf16 %v46, %v40
  %v107 = vpack.c.bf16 %v47, %v41
  %v108 = vpack.c.bf16 %v48, %v42
  %v109 = vpack.c.bf16 %v49, %v43
  %v110 = vpack.c.bf16 %v56, %v50
  %v111 = vpack.c.bf16 %v57, %v51
  %v112 = vpack.c.bf16 %v58, %v52
  %v113 = vpack.c.bf16 %v59, %v53
  %v114 = vpack.c.bf16 %v60, %v54
  %v115 = vpack.c.bf16 %v61, %v55
  %v116 = vpack.c.bf16 %v68, %v62
  %v117 = vpack.c.bf16 %v69, %v63
  %v118 = vpack.c.bf16 %v70, %v64
  %v119 = vpack.c.bf16 %v71, %v65
  %v120 = vpack.c.bf16 %v72, %v66
  %v121 = vpack.c.bf16 %v73, %v67
  %v122 = vpack.c.bf16 %v80, %v74
  %v123 = vpack.c.bf16 %v81, %v75
  %v124 = vpack.c.bf16 %v82, %v76
  %v125 = vpack.c.bf16 %v83, %v77
  %v126 = vpack.c.bf16 %v84, %v78
  %v127 = vpack.c.bf16 %v85, %v79
  %v128 = vpack.c.bf16 %v86, %v86
  %v129 = vpack.c.bf16 %v87, %v87
  %v130 = vpack.c.bf16 %v88, %v88
  %v131 = vpack.c.bf16 %v89, %v89
  %v132 = vpack.c.bf16 %v90, %v90
  %v133 = vpack.c.bf16 %v91, %v91
  %v134 = vld [vmem:[%s1] sm:$0xff]
  %v135 = vld [vmem:[%s1 + $0x8] sm:$0xff]
  %v136 = vld [vmem:[%s1 + $0x10] sm:$0xff]
  %v137 = vld [vmem:[%s1 + $0x18] sm:$0xff]
  %v138 = vld [vmem:[%s1 + $0x20] sm:$0xff]
  %v139 = vld [vmem:[%s1 + $0x28] sm:$0xff]
  %v140 = vld [vmem:[%s1 + $0x30] sm:$0xff]
  %v141 = vld [vmem:[%s1 + $0x38] sm:$0xff]
  %v142 = vld [vmem:[%s1 + $0x40] sm:$0xff]
  %v143 = vld [vmem:[%s1 + $0x48] sm:$0xff]
  %v144 = vld [vmem:[%s1 + $0x50] sm:$0xff]
  %v145 = vld [vmem:[%s1 + $0x58] sm:$0xff]
  %v146 = vld [vmem:[%s1 + $0x60] sm:$0xff]
  %v147 = vld [vmem:[%s1 + $0x68] sm:$0xff]
  %v148 = vld [vmem:[%s1 + $0x70] sm:$0xff]
  %v149 = vld [vmem:[%s1 + $0x78] sm:$0xff]
  %v150 = vld [vmem:[%s1 + $0x80] sm:$0xff]
  %v151 = vld [vmem:[%s1 + $0x88] sm:$0xff]
  %v152 = vld [vmem:[%s1 + $0x90] sm:$0xff]
  %v153 = vld [vmem:[%s1 + $0x98] sm:$0xff]
  %v154 = vld [vmem:[%s1 + $0xa0] sm:$0xff]
  %v155 = vld [vmem:[%s1 + $0xa8] sm:$0xff]
  %v156 = vld [vmem:[%s1 + $0xb0] sm:$0xff]
  %v157 = vld [vmem:[%s1 + $0xb8] sm:$0xff]
  %v158 = vld [vmem:[%s1 + $0xc0] sm:$0xff]
  %v159 = vld [vmem:[%s1 + $0xc8] sm:$0xff]
  %v160 = vld [vmem:[%s1 + $0xd0] sm:$0xff]
  %v161 = vld [vmem:[%s1 + $0xd8] sm:$0xff]
  %v162 = vld [vmem:[%s1 + $0xe0] sm:$0xff]
  %v163 = vld [vmem:[%s1 + $0xe8] sm:$0xff]
  %v164 = vld [vmem:[%s1 + $0xf0] sm:$0xff]
  %v165 = vld [vmem:[%s1 + $0xf8] sm:$0xff]
  %v166 = vld [vmem:[%s1 + $0x100] sm:$0xff]
  %v167 = vld [vmem:[%s1 + $0x108] sm:$0xff]
  %v168 = vld [vmem:[%s1 + $0x110] sm:$0xff]
  %v169 = vld [vmem:[%s1 + $0x118] sm:$0xff]
  %v170 = vld [vmem:[%s1 + $0x120] sm:$0xff]
  %v171 = vld [vmem:[%s1 + $0x128] sm:$0xff]
  %v172 = vld [vmem:[%s1 + $0x130] sm:$0xff]
  %v173 = vld [vmem:[%s1 + $0x138] sm:$0xff]
  %v174 = vld [vmem:[%s1 + $0x140] sm:$0xff]
  %v175 = vld [vmem:[%s1 + $0x148] sm:$0xff]
  %v176 = vld [vmem:[%s1 + $0x150] sm:$0xff]
  %v177 = vld [vmem:[%s1 + $0x158] sm:$0xff]
  %v178 = vld [vmem:[%s1 + $0x160] sm:$0xff]
  %v179 = vld [vmem:[%s1 + $0x168] sm:$0xff]
  %v180 = vld [vmem:[%s1 + $0x170] sm:$0xff]
  %v181 = vld [vmem:[%s1 + $0x178] sm:$0xff]
  %v182 = vld [vmem:[%s1 + $0x180] sm:$0xff]
  %v183 = vld [vmem:[%s1 + $0x188] sm:$0xff]
  %v184 = vld [vmem:[%s1 + $0x190] sm:$0xff]
  %v185 = vld [vmem:[%s1 + $0x198] sm:$0xff]
  %v186 = vld [vmem:[%s1 + $0x1a0] sm:$0xff]
  %v187 = vld [vmem:[%s1 + $0x1a8] sm:$0xff]
  %v188 = vld [vmem:[%s1 + $0x1b0] sm:$0xff]
  %v189 = vld [vmem:[%s1 + $0x1b8] sm:$0xff]
  %v190 = vld [vmem:[%s1 + $0x1c0] sm:$0xff]
  %v191 = vld [vmem:[%s1 + $0x1c8] sm:$0xff]
  %v192 = vld [vmem:[%s1 + $0x1d0] sm:$0xff]
  %v193 = vld [vmem:[%s1 + $0x1d8] sm:$0xff]
  %v194 = vld [vmem:[%s1 + $0x1e0] sm:$0xff]
  %v195 = vld [vmem:[%s1 + $0x1e8] sm:$0xff]
  %v196 = vld [vmem:[%s1 + $0x1f0] sm:$0xff]
  %v197 = vld [vmem:[%s1 + $0x1f8] sm:$0xff]
  %v198 = vld [vmem:[%s1 + $0x200] sm:$0xff]
  %v199 = vld [vmem:[%s1 + $0x208] sm:$0xff]
  %v200 = vld [vmem:[%s1 + $0x210] sm:$0xff]
  %v201 = vld [vmem:[%s1 + $0x218] sm:$0xff]
  %v202 = vld [vmem:[%s1 + $0x220] sm:$0xff]
  %v203 = vld [vmem:[%s1 + $0x228] sm:$0xff]
  %v204 = vld [vmem:[%s1 + $0x230] sm:$0xff]
  %v205 = vld [vmem:[%s1 + $0x238] sm:$0xff]
  %v206 = vld [vmem:[%s1 + $0x240] sm:$0xff]
  %v207 = vld [vmem:[%s1 + $0x248] sm:$0xff]
  %v208 = vld [vmem:[%s1 + $0x250] sm:$0xff]
  %v209 = vld [vmem:[%s1 + $0x258] sm:$0xff]
  %v210 = vld [vmem:[%s1 + $0x260] sm:$0xff]
  %v211 = vld [vmem:[%s1 + $0x268] sm:$0xff]
  %v212 = vld [vmem:[%s1 + $0x270] sm:$0xff]
  %v213 = vld [vmem:[%s1 + $0x278] sm:$0xff]
  %v214 = vld [vmem:[%s1 + $0x280] sm:$0xff]
  %v215 = vld [vmem:[%s1 + $0x288] sm:$0xff]
  %v216 = vld [vmem:[%s1 + $0x290] sm:$0xff]
  %v217 = vld [vmem:[%s1 + $0x298] sm:$0xff]
  %v218 = vld [vmem:[%s1 + $0x2a0] sm:$0xff]
  %v219 = vld [vmem:[%s1 + $0x2a8] sm:$0xff]
  %v220 = vld [vmem:[%s1 + $0x2b0] sm:$0xff]
  %v221 = vld [vmem:[%s1 + $0x2b8] sm:$0xff]
  %v222 = vld [vmem:[%s1 + $0x2c0] sm:$0xff]
  %v223 = vld [vmem:[%s1 + $0x2c8] sm:$0xff]
  %v224 = vld [vmem:[%s1 + $0x2d0] sm:$0xff]
  %v225 = vld [vmem:[%s1 + $0x2d8] sm:$0xff]
  %v226 = vld [vmem:[%s1 + $0x2e0] sm:$0xff]
  %v227 = vld [vmem:[%s1 + $0x2e8] sm:$0xff]
  %v228 = vld [vmem:[%s1 + $0x2f0] sm:$0xff]
  %v229 = vld [vmem:[%s1 + $0x2f8] sm:$0xff]
  %v230 = vld [vmem:[%s2] sm:$0x3]
  %v232 = vlaneseq
  %v233 = vshrl.u32 %v232, 7
  %v234 = vsub.s32 0, %v233
  %v235 = vrot.slane %v230, %v234
  %v236 = vlaneseq
  %v237 = vshrl.u32 %v236, 7
  %v238 = vsub.s32 1, %v237
  %v239 = vrot.slane %v230, %v238
  %v338 = vunpack.c.l.b16 %v134
  %v339 = vunpack.c.h.b16 %v134
  %v340 = vunpack.c.l.b16 %v135
  %v341 = vunpack.c.h.b16 %v135
  %v342 = vunpack.c.l.b16 %v136
  %v343 = vunpack.c.h.b16 %v136
  %v344 = vunpack.c.l.b16 %v137
  %v345 = vunpack.c.h.b16 %v137
  %v346 = vunpack.c.l.b16 %v138
  %v347 = vunpack.c.h.b16 %v138
  %v348 = vunpack.c.l.b16 %v139
  %v349 = vunpack.c.h.b16 %v139
  %v350 = vunpack.c.l.b16 %v140
  %v351 = vunpack.c.h.b16 %v140
  %v352 = vunpack.c.l.b16 %v141
  %v353 = vunpack.c.h.b16 %v141
  %v354 = vunpack.c.l.b16 %v142
  %v355 = vunpack.c.h.b16 %v142
  %v356 = vunpack.c.l.b16 %v143
  %v357 = vunpack.c.h.b16 %v143
  %v358 = vunpack.c.l.b16 %v144
  %v359 = vunpack.c.h.b16 %v144
  %v360 = vunpack.c.l.b16 %v145
  %v361 = vunpack.c.h.b16 %v145
  %v362 = vunpack.c.l.b16 %v146
  %v363 = vunpack.c.h.b16 %v146
  %v364 = vunpack.c.l.b16 %v147
  %v365 = vunpack.c.h.b16 %v147
  %v366 = vunpack.c.l.b16 %v148
  %v367 = vunpack.c.h.b16 %v148
  %v368 = vunpack.c.l.b16 %v149
  %v369 = vunpack.c.h.b16 %v149
  %v370 = vunpack.c.l.b16 %v150
  %v371 = vunpack.c.h.b16 %v150
  %v372 = vunpack.c.l.b16 %v151
  %v373 = vunpack.c.h.b16 %v151
  %v374 = vunpack.c.l.b16 %v152
  %v375 = vunpack.c.h.b16 %v152
  %v376 = vunpack.c.l.b16 %v153
  %v377 = vunpack.c.h.b16 %v153
  %v378 = vunpack.c.l.b16 %v154
  %v379 = vunpack.c.h.b16 %v154
  %v380 = vunpack.c.l.b16 %v155
  %v381 = vunpack.c.h.b16 %v155
  %v382 = vunpack.c.l.b16 %v156
  %v383 = vunpack.c.h.b16 %v156
  %v384 = vunpack.c.l.b16 %v157
  %v385 = vunpack.c.h.b16 %v157
  %v386 = vunpack.c.l.b16 %v158
  %v387 = vunpack.c.h.b16 %v158
  %v388 = vunpack.c.l.b16 %v159
  %v389 = vunpack.c.h.b16 %v159
  %v390 = vunpack.c.l.b16 %v160
  %v391 = vunpack.c.h.b16 %v160
  %v392 = vunpack.c.l.b16 %v161
  %v393 = vunpack.c.h.b16 %v161
  %v394 = vunpack.c.l.b16 %v162
  %v395 = vunpack.c.h.b16 %v162
  %v396 = vunpack.c.l.b16 %v163
  %v397 = vunpack.c.h.b16 %v163
  %v398 = vunpack.c.l.b16 %v164
  %v399 = vunpack.c.h.b16 %v164
  %v400 = vunpack.c.l.b16 %v165
  %v401 = vunpack.c.h.b16 %v165
  %v402 = vunpack.c.l.b16 %v166
  %v403 = vunpack.c.h.b16 %v166
  %v404 = vunpack.c.l.b16 %v167
  %v405 = vunpack.c.h.b16 %v167
  %v406 = vunpack.c.l.b16 %v168
  %v407 = vunpack.c.h.b16 %v168
  %v408 = vunpack.c.l.b16 %v169
  %v409 = vunpack.c.h.b16 %v169
  %v410 = vunpack.c.l.b16 %v170
  %v411 = vunpack.c.h.b16 %v170
  %v412 = vunpack.c.l.b16 %v171
  %v413 = vunpack.c.h.b16 %v171
  %v414 = vunpack.c.l.b16 %v172
  %v415 = vunpack.c.h.b16 %v172
  %v416 = vunpack.c.l.b16 %v173
  %v417 = vunpack.c.h.b16 %v173
  %v418 = vunpack.c.l.b16 %v174
  %v419 = vunpack.c.h.b16 %v174
  %v420 = vunpack.c.l.b16 %v175
  %v421 = vunpack.c.h.b16 %v175
  %v422 = vunpack.c.l.b16 %v176
  %v423 = vunpack.c.h.b16 %v176
  %v424 = vunpack.c.l.b16 %v177
  %v425 = vunpack.c.h.b16 %v177
  %v426 = vunpack.c.l.b16 %v178
  %v427 = vunpack.c.h.b16 %v178
  %v428 = vunpack.c.l.b16 %v179
  %v429 = vunpack.c.h.b16 %v179
  %v430 = vunpack.c.l.b16 %v180
  %v431 = vunpack.c.h.b16 %v180
  %v432 = vunpack.c.l.b16 %v181
  %v433 = vunpack.c.h.b16 %v181
  %v434 = vunpack.c.l.b16 %v182
  %v435 = vunpack.c.h.b16 %v182
  %v436 = vunpack.c.l.b16 %v183
  %v437 = vunpack.c.h.b16 %v183
  %v438 = vunpack.c.l.b16 %v184
  %v439 = vunpack.c.h.b16 %v184
  %v440 = vunpack.c.l.b16 %v185
  %v441 = vunpack.c.h.b16 %v185
  %v442 = vunpack.c.l.b16 %v186
  %v443 = vunpack.c.h.b16 %v186
  %v444 = vunpack.c.l.b16 %v187
  %v445 = vunpack.c.h.b16 %v187
  %v446 = vunpack.c.l.b16 %v188
  %v447 = vunpack.c.h.b16 %v188
  %v448 = vunpack.c.l.b16 %v189
  %v449 = vunpack.c.h.b16 %v189
  %v450 = vunpack.c.l.b16 %v190
  %v451 = vunpack.c.h.b16 %v190
  %v452 = vunpack.c.l.b16 %v191
  %v453 = vunpack.c.h.b16 %v191
  %v454 = vunpack.c.l.b16 %v192
  %v455 = vunpack.c.h.b16 %v192
  %v456 = vunpack.c.l.b16 %v193
  %v457 = vunpack.c.h.b16 %v193
  %v458 = vunpack.c.l.b16 %v194
  %v459 = vunpack.c.h.b16 %v194
  %v460 = vunpack.c.l.b16 %v195
  %v461 = vunpack.c.h.b16 %v195
  %v462 = vunpack.c.l.b16 %v196
  %v463 = vunpack.c.h.b16 %v196
  %v464 = vunpack.c.l.b16 %v197
  %v465 = vunpack.c.h.b16 %v197
  %v466 = vunpack.c.l.b16 %v198
  %v467 = vunpack.c.h.b16 %v198
  %v468 = vunpack.c.l.b16 %v199
  %v469 = vunpack.c.h.b16 %v199
  %v470 = vunpack.c.l.b16 %v200
  %v471 = vunpack.c.h.b16 %v200
  %v472 = vunpack.c.l.b16 %v201
  %v473 = vunpack.c.h.b16 %v201
  %v474 = vunpack.c.l.b16 %v202
  %v475 = vunpack.c.h.b16 %v202
  %v476 = vunpack.c.l.b16 %v203
  %v477 = vunpack.c.h.b16 %v203
  %v478 = vunpack.c.l.b16 %v204
  %v479 = vunpack.c.h.b16 %v204
  %v480 = vunpack.c.l.b16 %v205
  %v481 = vunpack.c.h.b16 %v205
  %v482 = vunpack.c.l.b16 %v206
  %v483 = vunpack.c.h.b16 %v206
  %v484 = vunpack.c.l.b16 %v207
  %v485 = vunpack.c.h.b16 %v207
  %v486 = vunpack.c.l.b16 %v208
  %v487 = vunpack.c.h.b16 %v208
  %v488 = vunpack.c.l.b16 %v209
  %v489 = vunpack.c.h.b16 %v209
  %v490 = vunpack.c.l.b16 %v210
  %v491 = vunpack.c.h.b16 %v210
  %v492 = vunpack.c.l.b16 %v211
  %v493 = vunpack.c.h.b16 %v211
  %v494 = vunpack.c.l.b16 %v212
  %v495 = vunpack.c.h.b16 %v212
  %v496 = vunpack.c.l.b16 %v213
  %v497 = vunpack.c.h.b16 %v213
  %v498 = vunpack.c.l.b16 %v214
  %v499 = vunpack.c.h.b16 %v214
  %v500 = vunpack.c.l.b16 %v215
  %v501 = vunpack.c.h.b16 %v215
  %v502 = vunpack.c.l.b16 %v216
  %v503 = vunpack.c.h.b16 %v216
  %v504 = vunpack.c.l.b16 %v217
  %v505 = vunpack.c.h.b16 %v217
  %v506 = vunpack.c.l.b16 %v218
  %v507 = vunpack.c.h.b16 %v218
  %v508 = vunpack.c.l.b16 %v219
  %v509 = vunpack.c.h.b16 %v219
  %v510 = vunpack.c.l.b16 %v220
  %v511 = vunpack.c.h.b16 %v220
  %v512 = vunpack.c.l.b16 %v221
  %v513 = vunpack.c.h.b16 %v221
  %v514 = vunpack.c.l.b16 %v222
  %v515 = vunpack.c.h.b16 %v222
  %v516 = vunpack.c.l.b16 %v223
  %v517 = vunpack.c.h.b16 %v223
  %v518 = vunpack.c.l.b16 %v224
  %v519 = vunpack.c.h.b16 %v224
  %v520 = vunpack.c.l.b16 %v225
  %v521 = vunpack.c.h.b16 %v225
  %v522 = vunpack.c.l.b16 %v226
  %v523 = vunpack.c.h.b16 %v226
  %v524 = vunpack.c.l.b16 %v227
  %v525 = vunpack.c.h.b16 %v227
  %v526 = vunpack.c.l.b16 %v228
  %v527 = vunpack.c.h.b16 %v228
  %v528 = vunpack.c.l.b16 %v229
  %v529 = vunpack.c.h.b16 %v229
  %v530 = vpack.c.b16 %v340, %v338
  %v531 = vpack.c.b16 %v341, %v339
  %v532 = vpack.c.b16 %v344, %v342
  %v533 = vpack.c.b16 %v345, %v343
  %v534 = vpack.c.b16 %v348, %v346
  %v535 = vpack.c.b16 %v349, %v347
  %v536 = vpack.c.b16 %v352, %v350
  %v537 = vpack.c.b16 %v353, %v351
  %v538 = vpack.c.b16 %v356, %v354
  %v539 = vpack.c.b16 %v357, %v355
  %v540 = vpack.c.b16 %v360, %v358
  %v541 = vpack.c.b16 %v361, %v359
  %v542 = vpack.c.b16 %v364, %v362
  %v543 = vpack.c.b16 %v365, %v363
  %v544 = vpack.c.b16 %v368, %v366
  %v545 = vpack.c.b16 %v369, %v367
  %v546 = vpack.c.b16 %v372, %v370
  %v547 = vpack.c.b16 %v373, %v371
  %v548 = vpack.c.b16 %v376, %v374
  %v549 = vpack.c.b16 %v377, %v375
  %v550 = vpack.c.b16 %v380, %v378
  %v551 = vpack.c.b16 %v381, %v379
  %v552 = vpack.c.b16 %v384, %v382
  %v553 = vpack.c.b16 %v385, %v383
  %v554 = vpack.c.b16 %v388, %v386
  %v555 = vpack.c.b16 %v389, %v387
  %v556 = vpack.c.b16 %v392, %v390
  %v557 = vpack.c.b16 %v393, %v391
  %v558 = vpack.c.b16 %v396, %v394
  %v559 = vpack.c.b16 %v397, %v395
  %v560 = vpack.c.b16 %v400, %v398
  %v561 = vpack.c.b16 %v401, %v399
  %v562 = vpack.c.b16 %v404, %v402
  %v563 = vpack.c.b16 %v405, %v403
  %v564 = vpack.c.b16 %v408, %v406
  %v565 = vpack.c.b16 %v409, %v407
  %v566 = vpack.c.b16 %v412, %v410
  %v567 = vpack.c.b16 %v413, %v411
  %v568 = vpack.c.b16 %v416, %v414
  %v569 = vpack.c.b16 %v417, %v415
  %v570 = vpack.c.b16 %v420, %v418
  %v571 = vpack.c.b16 %v421, %v419
  %v572 = vpack.c.b16 %v424, %v422
  %v573 = vpack.c.b16 %v425, %v423
  %v574 = vpack.c.b16 %v428, %v426
  %v575 = vpack.c.b16 %v429, %v427
  %v576 = vpack.c.b16 %v432, %v430
  %v577 = vpack.c.b16 %v433, %v431
  %v578 = vpack.c.b16 %v436, %v434
  %v579 = vpack.c.b16 %v437, %v435
  %v580 = vpack.c.b16 %v440, %v438
  %v581 = vpack.c.b16 %v441, %v439
  %v582 = vpack.c.b16 %v444, %v442
  %v583 = vpack.c.b16 %v445, %v443
  %v584 = vpack.c.b16 %v448, %v446
  %v585 = vpack.c.b16 %v449, %v447
  %v586 = vpack.c.b16 %v452, %v450
  %v587 = vpack.c.b16 %v453, %v451
  %v588 = vpack.c.b16 %v456, %v454
  %v589 = vpack.c.b16 %v457, %v455
  %v590 = vpack.c.b16 %v460, %v458
  %v591 = vpack.c.b16 %v461, %v459
  %v592 = vpack.c.b16 %v464, %v462
  %v593 = vpack.c.b16 %v465, %v463
  %v594 = vpack.c.b16 %v468, %v466
  %v595 = vpack.c.b16 %v469, %v467
  %v596 = vpack.c.b16 %v472, %v470
  %v597 = vpack.c.b16 %v473, %v471
  %v598 = vpack.c.b16 %v476, %v474
  %v599 = vpack.c.b16 %v477, %v475
  %v600 = vpack.c.b16 %v480, %v478
  %v601 = vpack.c.b16 %v481, %v479
  %v602 = vpack.c.b16 %v484, %v482
  %v603 = vpack.c.b16 %v485, %v483
  %v604 = vpack.c.b16 %v488, %v486
  %v605 = vpack.c.b16 %v489, %v487
  %v606 = vpack.c.b16 %v492, %v490
  %v607 = vpack.c.b16 %v493, %v491
  %v608 = vpack.c.b16 %v496, %v494
  %v609 = vpack.c.b16 %v497, %v495
  %v610 = vpack.c.b16 %v500, %v498
  %v611 = vpack.c.b16 %v501, %v499
  %v612 = vpack.c.b16 %v504, %v502
  %v613 = vpack.c.b16 %v505, %v503
  %v614 = vpack.c.b16 %v508, %v506
  %v615 = vpack.c.b16 %v509, %v507
  %v616 = vpack.c.b16 %v512, %v510
  %v617 = vpack.c.b16 %v513, %v511
  %v618 = vpack.c.b16 %v516, %v514
  %v619 = vpack.c.b16 %v517, %v515
  %v620 = vpack.c.b16 %v520, %v518
  %v621 = vpack.c.b16 %v521, %v519
  %v622 = vpack.c.b16 %v524, %v522
  %v623 = vpack.c.b16 %v525, %v523
  %v624 = vpack.c.b16 %v528, %v526
  %v625 = vpack.c.b16 %v529, %v527
  %722 = vmatprep.subr.bf16.mxu0 %v531
  %723 = vmatpush1.bf16.msra.mxu0 %v530
  %724 = vmatprep.subr.bf16.mxu0 %v533
  %725 = vmatpush1.bf16.msra.mxu0 %v532
  %726 = vmatprep.subr.bf16.mxu0 %v535
  %727 = vmatpush1.bf16.msra.mxu0 %v534
  %728 = vmatprep.subr.bf16.mxu0 %v537
  %729 = vmatpush1.bf16.msra.mxu0 %v536
  %730 = vmatprep.subr.bf16.mxu0 %v539
  %731 = vmatpush1.bf16.msra.mxu0 %v538
  %732 = vmatprep.subr.bf16.mxu0 %v541
  %733 = vmatpush1.bf16.msra.mxu0 %v540
  %734 = vmatprep.subr.bf16.mxu0 %v543
  %735 = vmatpush1.bf16.msra.mxu0 %v542
  %736 = vmatprep.subr.bf16.mxu0 %v545
  %737 = vmatpush1.bf16.msra.mxu0 %v544
  %738 = vmatprep.subr.bf16.mxu0 %v547
  %739 = vmatpush1.bf16.msra.mxu0 %v546
  %740 = vmatprep.subr.bf16.mxu0 %v549
  %741 = vmatpush1.bf16.msra.mxu0 %v548
  %742 = vmatprep.subr.bf16.mxu0 %v551
  %743 = vmatpush1.bf16.msra.mxu0 %v550
  %744 = vmatprep.subr.bf16.mxu0 %v553
  %745 = vmatpush1.bf16.msra.mxu0 %v552
  %746 = vmatprep.subr.bf16.mxu0 %v555
  %747 = vmatpush1.bf16.msra.mxu0 %v554
  %748 = vmatprep.subr.bf16.mxu0 %v557
  %749 = vmatpush1.bf16.msra.mxu0 %v556
  %750 = vmatprep.subr.bf16.mxu0 %v559
  %751 = vmatpush1.bf16.msra.mxu0 %v558
  %752 = vmatprep.subr.bf16.mxu0 %v561
  %753 = vmatpush1.bf16.msra.mxu0 %v560
  %754 = vmatprep.mubr.bf16.mxu0 %v93
  %755 = vmatmul.mubr.bf16.gmra.mrb[0].mxu0 %v92
  %v756 = vpop.f32.mrb[0].mxu0
  %v757 = vadd.f32 %v235, %v756
  %v758 = vpop.f32.mrb[0].mxu0
  %v759 = vadd.f32 %v239, %v758
  %v760 = vpop.f32.mrb[0].mxu0
  %v761 = vadd.f32 %v235, %v760
  %v762 = vpop.f32.mrb[0].mxu0
  %v763 = vadd.f32 %v239, %v762
  %764 = vmatprep.mubr.bf16.mxu0 %v99
  %765 = vmatmul.mubr.bf16.gmra.mrb[0].mxu0 %v98
  %v766 = vpop.f32.mrb[0].mxu0
  %v767 = vadd.f32 %v235, %v766
  %v768 = vpop.f32.mrb[0].mxu0
  %v769 = vadd.f32 %v239, %v768
  %v770 = vpop.f32.mrb[0].mxu0
  %v771 = vadd.f32 %v235, %v770
  %v772 = vpop.f32.mrb[0].mxu0
  %v773 = vadd.f32 %v239, %v772
  %774 = vmatprep.mubr.bf16.mxu0 %v105
  %775 = vmatmul.mubr.bf16.gmra.mrb[0].mxu0 %v104
  %v776 = vpop.f32.mrb[0].mxu0
  %v777 = vadd.f32 %v235, %v776
  %v778 = vpop.f32.mrb[0].mxu0
  %v779 = vadd.f32 %v239, %v778
  %v780 = vpop.f32.mrb[0].mxu0
  %v781 = vadd.f32 %v235, %v780
  %v782 = vpop.f32.mrb[0].mxu0
  %v783 = vadd.f32 %v239, %v782
  %784 = vmatprep.mubr.bf16.mxu0 %v111
  %785 = vmatmul.mubr.bf16.gmra.mrb[0].mxu0 %v110
  %v786 = vpop.f32.mrb[0].mxu0
  %v787 = vadd.f32 %v235, %v786
  %v788 = vpop.f32.mrb[0].mxu0
  %v789 = vadd.f32 %v239, %v788
  %v790 = vpop.f32.mrb[0].mxu0
  %v791 = vadd.f32 %v235, %v790
  %v792 = vpop.f32.mrb[0].mxu0
  %v793 = vadd.f32 %v239, %v792
  %794 = vmatprep.mubr.bf16.mxu0 %v117
  %795 = vmatmul.mubr.bf16.gmra.mrb[0].mxu0 %v116
  %v796 = vpop.f32.mrb[0].mxu0
  %v797 = vadd.f32 %v235, %v796
  %v798 = vpop.f32.mrb[0].mxu0
  %v799 = vadd.f32 %v239, %v798
  %v800 = vpop.f32.mrb[0].mxu0
  %v801 = vadd.f32 %v235, %v800
  %v802 = vpop.f32.mrb[0].mxu0
  %v803 = vadd.f32 %v239, %v802
  %804 = vmatprep.mubr.bf16.mxu0 %v123
  %805 = vmatmul.mubr.bf16.gmra.mrb[0].mxu0 %v122
  %v806 = vpop.f32.mrb[0].mxu0
  %v807 = vadd.f32 %v235, %v806
  %v808 = vpop.f32.mrb[0].mxu0
  %v809 = vadd.f32 %v239, %v808
  %v810 = vpop.f32.mrb[0].mxu0
  %v811 = vadd.f32 %v235, %v810
  %v812 = vpop.f32.mrb[0].mxu0
  %v813 = vadd.f32 %v239, %v812
  %814 = vmatprep.mubr.bf16.mxu0 %v129
  %815 = vmatmul.mubr.bf16.gmra.mrb[0].mxu0 %v128
  %v816 = vpop.f32.mrb[0].mxu0
  %v817 = vadd.f32 %v235, %v816
  %v818 = vpop.f32.mrb[0].mxu0
  %v819 = vadd.f32 %v239, %v818
  %v820 = vpop.f32.mrb[0].mxu0
  %v821 = vpop.f32.mrb[0].mxu0
  %822 = vdwg.mxu0
  %823 = vmatprep.subr.bf16.mxu0 %v563
  %824 = vmatpush1.bf16.msra.mxu0 %v562
  %825 = vmatprep.subr.bf16.mxu0 %v565
  %826 = vmatpush1.bf16.msra.mxu0 %v564
  %827 = vmatprep.subr.bf16.mxu0 %v567
  %828 = vmatpush1.bf16.msra.mxu0 %v566
  %829 = vmatprep.subr.bf16.mxu0 %v569
  %830 = vmatpush1.bf16.msra.mxu0 %v568
  %831 = vmatprep.subr.bf16.mxu0 %v571
  %832 = vmatpush1.bf16.msra.mxu0 %v570
  %833 = vmatprep.subr.bf16.mxu0 %v573
  %834 = vmatpush1.bf16.msra.mxu0 %v572
  %835 = vmatprep.subr.bf16.mxu0 %v575
  %836 = vmatpush1.bf16.msra.mxu0 %v574
  %837 = vmatprep.subr.bf16.mxu0 %v577
  %838 = vmatpush1.bf16.msra.mxu0 %v576
  %839 = vmatprep.subr.bf16.mxu0 %v579
  %840 = vmatpush1.bf16.msra.mxu0 %v578
  %841 = vmatprep.subr.bf16.mxu0 %v581
  %842 = vmatpush1.bf16.msra.mxu0 %v580
  %843 = vmatprep.subr.bf16.mxu0 %v583
  %844 = vmatpush1.bf16.msra.mxu0 %v582
  %845 = vmatprep.subr.bf16.mxu0 %v585
  %846 = vmatpush1.bf16.msra.mxu0 %v584
  %847 = vmatprep.subr.bf16.mxu0 %v587
  %848 = vmatpush1.bf16.msra.mxu0 %v586
  %849 = vmatprep.subr.bf16.mxu0 %v589
  %850 = vmatpush1.bf16.msra.mxu0 %v588
  %851 = vmatprep.subr.bf16.mxu0 %v591
  %852 = vmatpush1.bf16.msra.mxu0 %v590
  %853 = vmatprep.subr.bf16.mxu0 %v593
  %854 = vmatpush1.bf16.msra.mxu0 %v592
  %855 = vmatprep.mubr.bf16.mxu0 %v95
  %856 = vmatmul.mubr.bf16.gmra.mrb[0].mxu0 %v94
  %v857 = vpop.f32.mrb[0].mxu0
  %v858 = vadd.f32 %v757, %v857
  %v859 = vpop.f32.mrb[0].mxu0
  %v860 = vadd.f32 %v759, %v859
  %v861 = vpop.f32.mrb[0].mxu0
  %v862 = vadd.f32 %v761, %v861
  %v863 = vpop.f32.mrb[0].mxu0
  %v864 = vadd.f32 %v763, %v863
  %865 = vmatprep.mubr.bf16.mxu0 %v101
  %866 = vmatmul.mubr.bf16.gmra.mrb[0].mxu0 %v100
  %v867 = vpop.f32.mrb[0].mxu0
  %v868 = vadd.f32 %v767, %v867
  %v869 = vpop.f32.mrb[0].mxu0
  %v870 = vadd.f32 %v769, %v869
  %v871 = vpop.f32.mrb[0].mxu0
  %v872 = vadd.f32 %v771, %v871
  %v873 = vpop.f32.mrb[0].mxu0
  %v874 = vadd.f32 %v773, %v873
  %875 = vmatprep.mubr.bf16.mxu0 %v107
  %876 = vmatmul.mubr.bf16.gmra.mrb[0].mxu0 %v106
  %v877 = vpop.f32.mrb[0].mxu0
  %v878 = vadd.f32 %v777, %v877
  %v879 = vpop.f32.mrb[0].mxu0
  %v880 = vadd.f32 %v779, %v879
  %v881 = vpop.f32.mrb[0].mxu0
  %v882 = vadd.f32 %v781, %v881
  %v883 = vpop.f32.mrb[0].mxu0
  %v884 = vadd.f32 %v783, %v883
  %885 = vmatprep.mubr.bf16.mxu0 %v113
  %886 = vmatmul.mubr.bf16.gmra.mrb[0].mxu0 %v112
  %v887 = vpop.f32.mrb[0].mxu0
  %v888 = vadd.f32 %v787, %v887
  %v889 = vpop.f32.mrb[0].mxu0
  %v890 = vadd.f32 %v789, %v889
  %v891 = vpop.f32.mrb[0].mxu0
  %v892 = vadd.f32 %v791, %v891
  %v893 = vpop.f32.mrb[0].mxu0
  %v894 = vadd.f32 %v793, %v893
  %895 = vmatprep.mubr.bf16.mxu0 %v119
  %896 = vmatmul.mubr.bf16.gmra.mrb[0].mxu0 %v118
  %v897 = vpop.f32.mrb[0].mxu0
  %v898 = vadd.f32 %v797, %v897
  %v899 = vpop.f32.mrb[0].mxu0
  %v900 = vadd.f32 %v799, %v899
  %v901 = vpop.f32.mrb[0].mxu0
  %v902 = vadd.f32 %v801, %v901
  %v903 = vpop.f32.mrb[0].mxu0
  %v904 = vadd.f32 %v803, %v903
  %905 = vmatprep.mubr.bf16.mxu0 %v125
  %906 = vmatmul.mubr.bf16.gmra.mrb[0].mxu0 %v124
  %v907 = vpop.f32.mrb[0].mxu0
  %v908 = vadd.f32 %v807, %v907
  %v909 = vpop.f32.mrb[0].mxu0
  %v910 = vadd.f32 %v809, %v909
  %v911 = vpop.f32.mrb[0].mxu0
  %v912 = vadd.f32 %v811, %v911
  %v913 = vpop.f32.mrb[0].mxu0
  %v914 = vadd.f32 %v813, %v913
  %915 = vmatprep.mubr.bf16.mxu0 %v131
  %916 = vmatmul.mubr.bf16.gmra.mrb[0].mxu0 %v130
  %v917 = vpop.f32.mrb[0].mxu0
  %v918 = vadd.f32 %v817, %v917
  %v919 = vpop.f32.mrb[0].mxu0
  %v920 = vadd.f32 %v819, %v919
  %v921 = vpop.f32.mrb[0].mxu0
  %v922 = vpop.f32.mrb[0].mxu0
  %923 = vdwg.mxu0
  %924 = vmatprep.subr.bf16.mxu0 %v595
  %925 = vmatpush1.bf16.msra.mxu0 %v594
  %926 = vmatprep.subr.bf16.mxu0 %v597
  %927 = vmatpush1.bf16.msra.mxu0 %v596
  %928 = vmatprep.subr.bf16.mxu0 %v599
  %929 = vmatpush1.bf16.msra.mxu0 %v598
  %930 = vmatprep.subr.bf16.mxu0 %v601
  %931 = vmatpush1.bf16.msra.mxu0 %v600
  %932 = vmatprep.subr.bf16.mxu0 %v603
  %933 = vmatpush1.bf16.msra.mxu0 %v602
  %934 = vmatprep.subr.bf16.mxu0 %v605
  %935 = vmatpush1.bf16.msra.mxu0 %v604
  %936 = vmatprep.subr.bf16.mxu0 %v607
  %937 = vmatpush1.bf16.msra.mxu0 %v606
  %938 = vmatprep.subr.bf16.mxu0 %v609
  %939 = vmatpush1.bf16.msra.mxu0 %v608
  %940 = vmatprep.subr.bf16.mxu0 %v611
  %941 = vmatpush1.bf16.msra.mxu0 %v610
  %942 = vmatprep.subr.bf16.mxu0 %v613
  %943 = vmatpush1.bf16.msra.mxu0 %v612
  %944 = vmatprep.subr.bf16.mxu0 %v615
  %945 = vmatpush1.bf16.msra.mxu0 %v614
  %946 = vmatprep.subr.bf16.mxu0 %v617
  %947 = vmatpush1.bf16.msra.mxu0 %v616
  %948 = vmatprep.subr.bf16.mxu0 %v619
  %949 = vmatpush1.bf16.msra.mxu0 %v618
  %950 = vmatprep.subr.bf16.mxu0 %v621
  %951 = vmatpush1.bf16.msra.mxu0 %v620
  %952 = vmatprep.subr.bf16.mxu0 %v623
  %953 = vmatpush1.bf16.msra.mxu0 %v622
  %954 = vmatprep.subr.bf16.mxu0 %v625
  %955 = vmatpush1.bf16.msra.mxu0 %v624
  %956 = vmatprep.mubr.bf16.mxu0 %v97
  %957 = vmatmul.mubr.bf16.gmra.mrb[0].mxu0 %v96
  %v958 = vpop.f32.mrb[0].mxu0
  %v959 = vadd.f32 %v858, %v958
  %v960 = vpop.f32.mrb[0].mxu0
  %v961 = vadd.f32 %v860, %v960
  %v962 = vpop.f32.mrb[0].mxu0
  %v963 = vadd.f32 %v862, %v962
  %v964 = vpop.f32.mrb[0].mxu0
  %v965 = vadd.f32 %v864, %v964
  %966 = vmatprep.mubr.bf16.mxu0 %v103
  %967 = vmatmul.mubr.bf16.gmra.mrb[0].mxu0 %v102
  %v968 = vpop.f32.mrb[0].mxu0
  %v969 = vadd.f32 %v868, %v968
  %v970 = vpop.f32.mrb[0].mxu0
  %v971 = vadd.f32 %v870, %v970
  %v972 = vpop.f32.mrb[0].mxu0
  %v973 = vadd.f32 %v872, %v972
  %v974 = vpop.f32.mrb[0].mxu0
  %v975 = vadd.f32 %v874, %v974
  %976 = vmatprep.mubr.bf16.mxu0 %v109
  %977 = vmatmul.mubr.bf16.gmra.mrb[0].mxu0 %v108
  %v978 = vpop.f32.mrb[0].mxu0
  %v979 = vadd.f32 %v878, %v978
  %v980 = vpop.f32.mrb[0].mxu0
  %v981 = vadd.f32 %v880, %v980
  %v982 = vpop.f32.mrb[0].mxu0
  %v983 = vadd.f32 %v882, %v982
  %v984 = vpop.f32.mrb[0].mxu0
  %v985 = vadd.f32 %v884, %v984
  %986 = vmatprep.mubr.bf16.mxu0 %v115
  %987 = vmatmul.mubr.bf16.gmra.mrb[0].mxu0 %v114
  %v988 = vpop.f32.mrb[0].mxu0
  %v989 = vadd.f32 %v888, %v988
  %v990 = vpop.f32.mrb[0].mxu0
  %v991 = vadd.f32 %v890, %v990
  %v992 = vpop.f32.mrb[0].mxu0
  %v993 = vadd.f32 %v892, %v992
  %v994 = vpop.f32.mrb[0].mxu0
  %v995 = vadd.f32 %v894, %v994
  %996 = vmatprep.mubr.bf16.mxu0 %v121
  %997 = vmatmul.mubr.bf16.gmra.mrb[0].mxu0 %v120
  %v998 = vpop.f32.mrb[0].mxu0
  %v999 = vadd.f32 %v898, %v998
  %v1000 = vpop.f32.mrb[0].mxu0
  %v1001 = vadd.f32 %v900, %v1000
  %v1002 = vpop.f32.mrb[0].mxu0
  %v1003 = vadd.f32 %v902, %v1002
  %v1004 = vpop.f32.mrb[0].mxu0
  %v1005 = vadd.f32 %v904, %v1004
  %1006 = vmatprep.mubr.bf16.mxu0 %v127
  %1007 = vmatmul.mubr.bf16.gmra.mrb[0].mxu0 %v126
  %v1008 = vpop.f32.mrb[0].mxu0
  %v1009 = vadd.f32 %v908, %v1008
  %v1010 = vpop.f32.mrb[0].mxu0
  %v1011 = vadd.f32 %v910, %v1010
  %v1012 = vpop.f32.mrb[0].mxu0
  %v1013 = vadd.f32 %v912, %v1012
  %v1014 = vpop.f32.mrb[0].mxu0
  %v1015 = vadd.f32 %v914, %v1014
  %1016 = vmatprep.mubr.bf16.mxu0 %v133
  %1017 = vmatmul.mubr.bf16.gmra.mrb[0].mxu0 %v132
  %v1018 = vpop.f32.mrb[0].mxu0
  %v1019 = vadd.f32 %v918, %v1018
  %v1020 = vpop.f32.mrb[0].mxu0
  %v1021 = vadd.f32 %v920, %v1020
  %v1022 = vpop.f32.mrb[0].mxu0
  %v1023 = vpop.f32.mrb[0].mxu0
  %1024 = vdwg.mxu0
  %1025 = vst [vmem:[%s3] sm:$0xff] %v959
  %1026 = vst [vmem:[%s3 + $0x8] sm:$0xff] %v961
  %1027 = vst [vmem:[%s3 + $0x10] sm:$0xff] %v963
  %1028 = vst [vmem:[%s3 + $0x18] sm:$0xff] %v965
  %1029 = vst [vmem:[%s3 + $0x20] sm:$0xff] %v969
  %1030 = vst [vmem:[%s3 + $0x28] sm:$0xff] %v971
  %1031 = vst [vmem:[%s3 + $0x30] sm:$0xff] %v973
  %1032 = vst [vmem:[%s3 + $0x38] sm:$0xff] %v975
  %1033 = vst [vmem:[%s3 + $0x40] sm:$0xff] %v979
  %1034 = vst [vmem:[%s3 + $0x48] sm:$0xff] %v981
  %1035 = vst [vmem:[%s3 + $0x50] sm:$0xff] %v983
  %1036 = vst [vmem:[%s3 + $0x58] sm:$0xff] %v985
  %1037 = vst [vmem:[%s3 + $0x60] sm:$0xff] %v989
  %1038 = vst [vmem:[%s3 + $0x68] sm:$0xff] %v991
  %1039 = vst [vmem:[%s3 + $0x70] sm:$0xff] %v993
  %1040 = vst [vmem:[%s3 + $0x78] sm:$0xff] %v995
  %1041 = vst [vmem:[%s3 + $0x80] sm:$0xff] %v999
  %1042 = vst [vmem:[%s3 + $0x88] sm:$0xff] %v1001
  %1043 = vst [vmem:[%s3 + $0x90] sm:$0xff] %v1003
  %1044 = vst [vmem:[%s3 + $0x98] sm:$0xff] %v1005
  %1045 = vst [vmem:[%s3 + $0xa0] sm:$0xff] %v1009
  %1046 = vst [vmem:[%s3 + $0xa8] sm:$0xff] %v1011
  %1047 = vst [vmem:[%s3 + $0xb0] sm:$0xff] %v1013
  %1048 = vst [vmem:[%s3 + $0xb8] sm:$0xff] %v1015
  %1049 = vst [vmem:[%s3 + $0xc0] sm:$0xff] %v1019
  %1050 = vst [vmem:[%s3 + $0xc8] sm:$0xff] %v1021
  // Predicated region
  $region14: #{_lambda_.1} parent=0 // pred_check
    _
  $region15: #{_lambda_.1} parent=0 // pred_check_branch
    %1052 = sbr.rel (0) target = $region17
  $region16: #{_lambda_.1} parent=0 // pred_region
    _
  $region17: #{_lambda_.1} parent=0 // pred_fallthru
    _
  // Predicated region
  $region18: #{_lambda_.1} parent=0 // pred_check
    _
  $region19: #{_lambda_.1} parent=0 // pred_check_branch
    %1054 = sbr.rel (0) target = $region21
  $region20: #{_lambda_.1} parent=0 // pred_region
    _
  $region21: #{_lambda_.1} parent=0 // pred_fallthru
    _

</llo_original>
